<compile_context>
chip_gen: v5e
topology: v5e:2x2
jax: 0.10.0
libtpu: 0.0.40
codegen_flags: <defaults>
</compile_context>

<pallas_src>
import jax
import jax.numpy as jnp
from jax.experimental import pallas as pl
from jax.experimental.pallas import tpu as pltpu

WINDOW_SIZE = 11
SIGMA = 1.5
C1 = 0.01 ** 2
C2 = 0.03 ** 2
MSE_WEIGHT = 1.0
SSIM_WEIGHT = 0.01


def _gaussian_window(window_size=WINDOW_SIZE, sigma=SIGMA):
    x = jnp.arange(window_size, dtype=jnp.float32)
    g = jnp.exp(-((x - window_size // 2) ** 2) / (2.0 * sigma ** 2))
    return g / jnp.sum(g)


def _band_matrix(n, g, window_size=WINDOW_SIZE):
    # M[out, in] = g[in - out + half]  (zero-padded "same" cross-correlation;
    # the Gaussian is symmetric so this equals convolution, and M is symmetric).
    half = window_size // 2
    idx = jnp.arange(n)
    diff = idx[None, :] - idx[:, None] + half  # (out, in)
    mask = (diff >= 0) & (diff < window_size)
    return jnp.where(mask, g[jnp.clip(diff, 0, window_size - 1)], 0.0).astype(
        jnp.float32
    )


def _pad_elems(r, c):
    """Elements actually occupied by an (r, c) f32 buffer after (8,128) tiling."""
    return ((r + 7) // 8) * 8 * ((c + 127) // 128) * 128


def _pick_lane_pack(n_imgs, w):
    """Images packed side-by-side along the lane axis.

    Largest divisor k of n_imgs with k*W <= 128 that still leaves >= 2 image
    groups, so the parallel grid axis can feed both TensorCores on v7x."""
    k_max = max(1, 128 // w)
    best = 1
    for k in range(1, min(k_max, n_imgs) + 1):
        if n_imgs % k == 0 and (n_imgs // k >= 2 or n_imgs == 1):
            best = k
    return best


def _pick_tile_groups(n_groups, h, lanes, max_unroll=8, max_tile_bytes=1 << 20):
    """Image groups per grid step: amortize per-step overhead for small images
    while keeping the per-input tile modest, the in-kernel unroll short and
    (when possible) >= 2 grid steps."""
    best = 1
    for g in range(1, n_groups + 1):
        if n_groups % g != 0 or g > max_unroll:
            continue
        if g * _pad_elems(h, lanes) * 4 > max_tile_bytes:
            continue
        if n_groups // g >= 2 or n_groups == 1:
            best = g
    return best


def _vmem_limit_bytes(tile_groups, h, lanes):
    tile = tile_groups * _pad_elems(h, lanes)
    est_elems = (
        2 * 2 * tile                      # p / t tiles, double-buffered
        + 2 * _pad_elems(h, h)            # resident (H,H) row-conv band matrix
        + 2 * _pad_elems(lanes, lanes)    # resident (L,L) lane-conv band matrix
        + 2 * _pad_elems(8, 128)          # per-tile partial-sum output block
        + 16 * tile                       # in-kernel temporaries (stats + maps)
    )
    est = 4 * est_elems
    cap = 64 * 1024 * 1024                # conservative fallback = v7x per-core VMEM
    try:
        cap = int(pltpu.get_tpu_info().vmem_capacity_bytes)
    except Exception:
        pass
    hi = max(16 * 1024 * 1024, min(int(0.75 * cap), 96 * 1024 * 1024))
    return int(min(max(2 * est, 32 * 1024 * 1024), hi))


def _mse_ssim_tile_kernel(p_ref, t_ref, mh_ref, mwb_ref, out_ref):
    # p_ref/t_ref: (G, H, L) tile -- G lane-packed groups of k images, L = k*W.
    # mh_ref:      (H, H)  Gaussian band matrix, row-axis conv (shared by all images).
    # mwb_ref:     (L, L)  block-diagonal Gaussian band matrix, lane-axis conv
    #              (k copies of the (W,W) band so packed images never mix; L <= 128).
    # out_ref:     (1, 8, 128) per-tile partials: [0,0,0]=ssim_sum, [0,0,1]=mse_sum.
    tile_groups = p_ref.shape[0]
    mh = mh_ref[...]
    mwb = mwb_ref[...]

    def filt(x):
        # Separable "same" Gaussian filter of one (H, L) slab: one row-conv
        # matmul plus one lane-conv matmul reusing the shared band matrices.
        y = jnp.dot(mh, x, preferred_element_type=jnp.float32)
        return jnp.dot(y, mwb, preferred_element_type=jnp.float32)

    ssim_sum = jnp.float32(0.0)
    mse_sum = jnp.float32(0.0)
    for gi in range(tile_groups):  # short static unroll (tile_groups <= 8)
        p = p_ref[gi]
        t = t_ref[gi]

        diff = p - t
        mse_sum = mse_sum + jnp.sum(diff * diff)

        mu1 = filt(p)
        mu2 = filt(t)
        mu1_sq = mu1 * mu1
        mu2_sq = mu2 * mu2
        mu1_mu2 = mu1 * mu2
        sigma1 = filt(p * p) - mu1_sq
        sigma2 = filt(t * t) - mu2_sq
        sigma12 = filt(p * t) - mu1_mu2

        num = (2.0 * mu1_mu2 + C1) * (2.0 * sigma12 + C2)
        den = (mu1_sq + mu2_sq + C1) * (sigma1 + sigma2 + C2)
        # Exact division (den > 0); approx reciprocal not needed for accuracy.
        ssim_sum = ssim_sum + jnp.sum(num / den)

    # Pack the two partial sums into a full (8, 128) vreg tile (lane-dense,
    # unmasked store); reduced in JAX outside the kernel.
    row = jax.lax.broadcasted_iota(jnp.int32, (8, 128), 0)
    col = jax.lax.broadcasted_iota(jnp.int32, (8, 128), 1)
    out_ref[0] = (jnp.where((row == 0) & (col == 0), ssim_sum, 0.0)
                  + jnp.where((row == 0) & (col == 1), mse_sum, 0.0))


def mse_ssim_loss(predicted, target, mse_weight=MSE_WEIGHT, ssim_weight=SSIM_WEIGHT):
    """predicted, target: NCHW float arrays (like the PyTorch module)."""
    n, c, h, w = predicted.shape
    n_imgs = n * c

    k = _pick_lane_pack(n_imgs, w)      # images packed along the lane axis
    lanes = k * w
    n_groups = n_imgs // k
    tile_groups = _pick_tile_groups(n_groups, h, lanes)
    n_tiles = n_groups // tile_groups

    def pack(x):
        # (N,C,H,W) -> (n_groups, H, k*W): k images side-by-side on the lane axis.
        x = x.reshape(n_groups, k, h, w).astype(jnp.float32)
        return x.transpose(0, 2, 1, 3).reshape(n_groups, h, lanes)

    p3 = pack(predicted)
    t3 = pack(target)

    g = _gaussian_window()
    mh = _band_matrix(h, g)                                      # (H, H), applied as M @ x
    mw = _band_matrix(w, g)                                      # (W, W), applied as x @ M.T
    mwb = jnp.kron(jnp.eye(k, dtype=jnp.float32), mw.T)          # (L, L), block-diag, L <= 128

    partials = pl.pallas_call(
        _mse_ssim_tile_kernel,
        out_shape=jax.ShapeDtypeStruct((n_tiles, 8, 128), jnp.float32),
        grid=(n_tiles,),
        in_specs=[
            pl.BlockSpec((tile_groups, h, lanes), lambda i: (i, 0, 0)),  # p tile
            pl.BlockSpec((tile_groups, h, lanes), lambda i: (i, 0, 0)),  # t tile
            pl.BlockSpec((h, h), lambda i: (0, 0)),          # resident row-conv band
            pl.BlockSpec((lanes, lanes), lambda i: (0, 0)),  # resident lane-conv band
        ],
        out_specs=pl.BlockSpec((1, 8, 128), lambda i: (i, 0, 0)),
        compiler_params=pltpu.CompilerParams(
            dimension_semantics=("parallel",),
            vmem_limit_bytes=_vmem_limit_bytes(tile_groups, h, lanes),
        ),
    )(p3, t3, mh, mwb)

    n_elems = float(n_imgs * h * w)
    ssim_mean = jnp.sum(partials[:, 0, 0]) / n_elems
    mse = jnp.sum(partials[:, 0, 1]) / n_elems
    return mse_weight * mse + ssim_weight * (1.0 - ssim_mean)


def _reference_loss(predicted, target):
    # Pure-JAX reference: depthwise 11x11 Gaussian conv via conv_general_dilated.
    n, c, h, w = predicted.shape
    g = _gaussian_window()
    win2d = jnp.outer(g, g)                                   # (11, 11)
    kernel = jnp.broadcast_to(win2d, (c, 1, WINDOW_SIZE, WINDOW_SIZE))

    def filt(x):
        return jax.lax.conv_general_dilated(
            x, kernel, window_strides=(1, 1),
            padding=[(WINDOW_SIZE // 2,) * 2] * 2,
            dimension_numbers=("NCHW", "OIHW", "NCHW"),
            feature_group_count=c,
        )

    p = predicted.astype(jnp.float32)
    t = target.astype(jnp.float32)
    mu1, mu2 = filt(p), filt(t)
    mu1_sq, mu2_sq, mu1_mu2 = mu1 * mu1, mu2 * mu2, mu1 * mu2
    s1 = filt(p * p) - mu1_sq
    s2 = filt(t * t) - mu2_sq
    s12 = filt(p * t) - mu1_mu2
    ssim_map = ((2 * mu1_mu2 + C1) * (2 * s12 + C2)) / (
        (mu1_sq + mu2_sq + C1) * (s1 + s2 + C2)
    )
    mse = jnp.mean((p - t) ** 2)
    return MSE_WEIGHT * mse + SSIM_WEIGHT * (1.0 - jnp.mean(ssim_map))


if __name__ == "__main__":
    loss_fn = jax.jit(mse_ssim_loss)

    def run_case(shape, case_id):
        kp, kt = jax.random.split(jax.random.fold_in(jax.random.PRNGKey(0), case_id))
        predicted = jax.random.uniform(kp, shape, dtype=jnp.float32)
        target = jax.random.uniform(kt, shape, dtype=jnp.float32)
        loss = loss_fn(predicted, target)
        jax.block_until_ready(loss)
        ref = _reference_loss(predicted, target)
        assert jnp.allclose(loss, ref, atol=2e-4, rtol=2e-4), (shape, float(loss), float(ref))

    # 8 images of 16x16: lane-pack k=4 (L=64), 2 parallel grid tiles.
    run_case((2, 4, 16, 16), 0)
    # 8 taller images (128x16): same packing, exercises larger row-conv matmul.
    run_case((2, 4, 128, 16), 1)
    # 16 images of 16x32: full 128-lane pack (k=4), 2 groups per grid step
    # (exercises the in-kernel static unroll over groups).
    run_case((4, 4, 16, 32), 2)

    print("KERNEL_OK")
</pallas_src>

<mosaic_0001>
module attributes {stable_mosaic.version = 11 : i64} {
  func.func @_mse_ssim_tile_kernel(%arg0: i32, %arg1: memref<1x16x64xf32, #tpu.memory_space<vmem>>, %arg2: memref<1x16x64xf32, #tpu.memory_space<vmem>>, %arg3: memref<16x16xf32, #tpu.memory_space<vmem>>, %arg4: memref<64x64xf32, #tpu.memory_space<vmem>>, %arg5: memref<1x8x128xf32, #tpu.memory_space<vmem>>) attributes {dimension_semantics = [#tpu.dimension_semantics<parallel>], iteration_bounds = array<i64: 2>, scalar_prefetch = 0 : i64, scratch_operands = 0 : i64, tpu.core_type = #tpu.core_type<tc>, window_params = [{transform_indices = @transform_0, window_bounds = array<i64: 1, 16, 64>}, {transform_indices = @transform_1, window_bounds = array<i64: 1, 16, 64>}, {pipeline_mode = #tpu.pipeline_mode<synchronous>, transform_indices = @transform_2, window_bounds = array<i64: 16, 16>}, {pipeline_mode = #tpu.pipeline_mode<synchronous>, transform_indices = @transform_3, window_bounds = array<i64: 64, 64>}, {transform_indices = @transform_4, window_bounds = array<i64: 1, 8, 128>}]} {
    %c0 = arith.constant 0 : index
    %c0_0 = arith.constant 0 : index
    %0 = vector.load %arg3[%c0, %c0_0] : memref<16x16xf32, #tpu.memory_space<vmem>>, vector<16x16xf32>
    %c0_1 = arith.constant 0 : index
    %c0_2 = arith.constant 0 : index
    %1 = vector.load %arg4[%c0_1, %c0_2] : memref<64x64xf32, #tpu.memory_space<vmem>>, vector<64x64xf32>
    %c0_3 = arith.constant 0 : index
    %c0_4 = arith.constant 0 : index
    %c0_5 = arith.constant 0 : index
    %2 = vector.load %arg1[%c0_3, %c0_4, %c0_5] : memref<1x16x64xf32, #tpu.memory_space<vmem>>, vector<1x16x64xf32>
    %3 = vector.shape_cast %2 : vector<1x16x64xf32> to vector<16x64xf32>
    %c0_6 = arith.constant 0 : index
    %c0_7 = arith.constant 0 : index
    %c0_8 = arith.constant 0 : index
    %4 = vector.load %arg2[%c0_6, %c0_7, %c0_8] : memref<1x16x64xf32, #tpu.memory_space<vmem>>, vector<1x16x64xf32>
    %5 = vector.shape_cast %4 : vector<1x16x64xf32> to vector<16x64xf32>
    %6 = arith.subf %3, %5 : vector<16x64xf32>
    %7 = arith.mulf %6, %6 : vector<16x64xf32>
    %8 = vector.shape_cast %7 : vector<16x64xf32> to vector<1x16x64xf32>
    %cst = arith.constant dense<0.000000e+00> : vector<1xf32>
    %9 = vector.multi_reduction <add>, %8, %cst [1, 2] : vector<1x16x64xf32> to vector<1xf32>
    %10 = vector.shape_cast %9 : vector<1xf32> to vector<1x1x1xf32>
    %11 = vector.extract %10[0, 0, 0] : f32 from vector<1x1x1xf32>
    %cst_9 = arith.constant 0.000000e+00 : f32
    %12 = arith.addf %cst_9, %11 : f32
    %cst_10 = arith.constant dense<0.000000e+00> : vector<16x64xf32>
    %13 = tpu.matmul %0, %3, %cst_10 {dimension_numbers = #tpu.dot_dimension_numbers<[1], [0], [0], [1], [0, 0, 1, 1], [], []>} : vector<16x16xf32>, vector<16x64xf32>, vector<16x64xf32> -> vector<16x64xf32>
    %cst_11 = arith.constant dense<0.000000e+00> : vector<16x64xf32>
    %14 = tpu.matmul %13, %1, %cst_11 {dimension_numbers = #tpu.dot_dimension_numbers<[1], [0], [0], [1], [0, 0, 1, 1], [], []>} : vector<16x64xf32>, vector<64x64xf32>, vector<16x64xf32> -> vector<16x64xf32>
    %cst_12 = arith.constant dense<0.000000e+00> : vector<16x64xf32>
    %15 = tpu.matmul %0, %5, %cst_12 {dimension_numbers = #tpu.dot_dimension_numbers<[1], [0], [0], [1], [0, 0, 1, 1], [], []>} : vector<16x16xf32>, vector<16x64xf32>, vector<16x64xf32> -> vector<16x64xf32>
    %cst_13 = arith.constant dense<0.000000e+00> : vector<16x64xf32>
    %16 = tpu.matmul %15, %1, %cst_13 {dimension_numbers = #tpu.dot_dimension_numbers<[1], [0], [0], [1], [0, 0, 1, 1], [], []>} : vector<16x64xf32>, vector<64x64xf32>, vector<16x64xf32> -> vector<16x64xf32>
    %17 = arith.mulf %14, %14 : vector<16x64xf32>
    %18 = arith.mulf %16, %16 : vector<16x64xf32>
    %19 = arith.mulf %14, %16 : vector<16x64xf32>
    %20 = arith.mulf %3, %3 : vector<16x64xf32>
    %cst_14 = arith.constant dense<0.000000e+00> : vector<16x64xf32>
    %21 = tpu.matmul %0, %20, %cst_14 {dimension_numbers = #tpu.dot_dimension_numbers<[1], [0], [0], [1], [0, 0, 1, 1], [], []>} : vector<16x16xf32>, vector<16x64xf32>, vector<16x64xf32> -> vector<16x64xf32>
    %cst_15 = arith.constant dense<0.000000e+00> : vector<16x64xf32>
    %22 = tpu.matmul %21, %1, %cst_15 {dimension_numbers = #tpu.dot_dimension_numbers<[1], [0], [0], [1], [0, 0, 1, 1], [], []>} : vector<16x64xf32>, vector<64x64xf32>, vector<16x64xf32> -> vector<16x64xf32>
    %23 = arith.subf %22, %17 : vector<16x64xf32>
    %24 = arith.mulf %5, %5 : vector<16x64xf32>
    %cst_16 = arith.constant dense<0.000000e+00> : vector<16x64xf32>
    %25 = tpu.matmul %0, %24, %cst_16 {dimension_numbers = #tpu.dot_dimension_numbers<[1], [0], [0], [1], [0, 0, 1, 1], [], []>} : vector<16x16xf32>, vector<16x64xf32>, vector<16x64xf32> -> vector<16x64xf32>
    %cst_17 = arith.constant dense<0.000000e+00> : vector<16x64xf32>
    %26 = tpu.matmul %25, %1, %cst_17 {dimension_numbers = #tpu.dot_dimension_numbers<[1], [0], [0], [1], [0, 0, 1, 1], [], []>} : vector<16x64xf32>, vector<64x64xf32>, vector<16x64xf32> -> vector<16x64xf32>
    %27 = arith.subf %26, %18 : vector<16x64xf32>
    %28 = arith.mulf %3, %5 : vector<16x64xf32>
    %cst_18 = arith.constant dense<0.000000e+00> : vector<16x64xf32>
    %29 = tpu.matmul %0, %28, %cst_18 {dimension_numbers = #tpu.dot_dimension_numbers<[1], [0], [0], [1], [0, 0, 1, 1], [], []>} : vector<16x16xf32>, vector<16x64xf32>, vector<16x64xf32> -> vector<16x64xf32>
    %cst_19 = arith.constant dense<0.000000e+00> : vector<16x64xf32>
    %30 = tpu.matmul %29, %1, %cst_19 {dimension_numbers = #tpu.dot_dimension_numbers<[1], [0], [0], [1], [0, 0, 1, 1], [], []>} : vector<16x64xf32>, vector<64x64xf32>, vector<16x64xf32> -> vector<16x64xf32>
    %31 = arith.subf %30, %19 : vector<16x64xf32>
    %cst_20 = arith.constant 2.000000e+00 : f32
    %32 = vector.broadcast %cst_20 : f32 to vector<16x64xf32>
    %33 = arith.mulf %32, %19 : vector<16x64xf32>
    %cst_21 = arith.constant 9.99999974E-5 : f32
    %34 = vector.broadcast %cst_21 : f32 to vector<16x64xf32>
    %35 = arith.addf %33, %34 : vector<16x64xf32>
    %cst_22 = arith.constant 2.000000e+00 : f32
    %36 = vector.broadcast %cst_22 : f32 to vector<16x64xf32>
    %37 = arith.mulf %36, %31 : vector<16x64xf32>
    %cst_23 = arith.constant 8.99999984E-4 : f32
    %38 = vector.broadcast %cst_23 : f32 to vector<16x64xf32>
    %39 = arith.addf %37, %38 : vector<16x64xf32>
    %40 = arith.mulf %35, %39 : vector<16x64xf32>
    %41 = arith.addf %17, %18 : vector<16x64xf32>
    %cst_24 = arith.constant 9.99999974E-5 : f32
    %42 = vector.broadcast %cst_24 : f32 to vector<16x64xf32>
    %43 = arith.addf %41, %42 : vector<16x64xf32>
    %44 = arith.addf %23, %27 : vector<16x64xf32>
    %cst_25 = arith.constant 8.99999984E-4 : f32
    %45 = vector.broadcast %cst_25 : f32 to vector<16x64xf32>
    %46 = arith.addf %44, %45 : vector<16x64xf32>
    %47 = arith.mulf %43, %46 : vector<16x64xf32>
    %48 = arith.divf %40, %47 : vector<16x64xf32>
    %49 = vector.shape_cast %48 : vector<16x64xf32> to vector<1x16x64xf32>
    %cst_26 = arith.constant dense<0.000000e+00> : vector<1xf32>
    %50 = vector.multi_reduction <add>, %49, %cst_26 [1, 2] : vector<1x16x64xf32> to vector<1xf32>
    %51 = vector.shape_cast %50 : vector<1xf32> to vector<1x1x1xf32>
    %52 = vector.extract %51[0, 0, 0] : f32 from vector<1x1x1xf32>
    %cst_27 = arith.constant 0.000000e+00 : f32
    %53 = arith.addf %cst_27, %52 : f32
    %54 = tpu.iota {dimensions = array<i32: 0>} : vector<8x128xi32>
    %55 = tpu.iota {dimensions = array<i32: 1>} : vector<8x128xi32>
    %c0_i32 = arith.constant 0 : i32
    %56 = vector.broadcast %c0_i32 : i32 to vector<8x128xi32>
    %57 = arith.cmpi eq, %54, %56 : vector<8x128xi32>
    %c0_i32_28 = arith.constant 0 : i32
    %58 = vector.broadcast %c0_i32_28 : i32 to vector<8x128xi32>
    %59 = arith.cmpi eq, %55, %58 : vector<8x128xi32>
    %60 = arith.andi %57, %59 : vector<8x128xi1>
    %cst_29 = arith.constant 0.000000e+00 : f32
    %61 = vector.broadcast %53 : f32 to vector<8x128xf32>
    %62 = vector.broadcast %cst_29 : f32 to vector<8x128xf32>
    %63 = arith.select %60, %61, %62 : vector<8x128xi1>, vector<8x128xf32>
    %c0_i32_30 = arith.constant 0 : i32
    %64 = vector.broadcast %c0_i32_30 : i32 to vector<8x128xi32>
    %65 = arith.cmpi eq, %54, %64 : vector<8x128xi32>
    %c1_i32 = arith.constant 1 : i32
    %66 = vector.broadcast %c1_i32 : i32 to vector<8x128xi32>
    %67 = arith.cmpi eq, %55, %66 : vector<8x128xi32>
    %68 = arith.andi %65, %67 : vector<8x128xi1>
    %cst_31 = arith.constant 0.000000e+00 : f32
    %69 = vector.broadcast %12 : f32 to vector<8x128xf32>
    %70 = vector.broadcast %cst_31 : f32 to vector<8x128xf32>
    %71 = arith.select %68, %69, %70 : vector<8x128xi1>, vector<8x128xf32>
    %72 = arith.addf %63, %71 : vector<8x128xf32>
    %c0_32 = arith.constant 0 : index
    %c0_33 = arith.constant 0 : index
    %c0_34 = arith.constant 0 : index
    %73 = vector.load %arg5[%c0_32, %c0_33, %c0_34] : memref<1x8x128xf32, #tpu.memory_space<vmem>>, vector<1x8x128xf32>
    %74 = vector.shape_cast %73 : vector<1x8x128xf32> to vector<8x128xf32>
    %75 = vector.shape_cast %72 : vector<8x128xf32> to vector<1x8x128xf32>
    tpu.vector_store %arg5[%c0_32, %c0_33, %c0_34], %75 {strides = array<i32>} : memref<1x8x128xf32, #tpu.memory_space<vmem>>, vector<1x8x128xf32>,
    return
  }
  func.func @transform_0(%arg0: i32) -> (i32, i32, i32) {
    %c0_i32 = arith.constant 0 : i32
    %c0_i32_0 = arith.constant 0 : i32
    %c0_i32_1 = arith.constant 0 : i32
    return %arg0, %c0_i32, %c0_i32_0 : i32, i32, i32
  }
  func.func @transform_1(%arg0: i32) -> (i32, i32, i32) {
    %c0_i32 = arith.constant 0 : i32
    %c0_i32_0 = arith.constant 0 : i32
    %c0_i32_1 = arith.constant 0 : i32
    return %arg0, %c0_i32, %c0_i32_0 : i32, i32, i32
  }
  func.func @transform_2(%arg0: i32) -> (i32, i32) {
    %c0_i32 = arith.constant 0 : i32
    %c0_i32_0 = arith.constant 0 : i32
    %c0_i32_1 = arith.constant 0 : i32
    return %c0_i32, %c0_i32_0 : i32, i32
  }
  func.func @transform_3(%arg0: i32) -> (i32, i32) {
    %c0_i32 = arith.constant 0 : i32
    %c0_i32_0 = arith.constant 0 : i32
    %c0_i32_1 = arith.constant 0 : i32
    return %c0_i32, %c0_i32_0 : i32, i32
  }
  func.func @transform_4(%arg0: i32) -> (i32, i32, i32) {
    %c0_i32 = arith.constant 0 : i32
    %c0_i32_0 = arith.constant 0 : i32
    %c0_i32_1 = arith.constant 0 : i32
    return %arg0, %c0_i32, %c0_i32_0 : i32, i32, i32
  }
}

</mosaic_0001>

<llo_original>
// kernel: mse_ssim_loss.1
$region0: #{mse_ssim_loss.1}
  #allocation0 [shape = 'u32[]', space=smem, size = 0x4, offset = 0x4, fixed_abs, tag = 'smem constant byte address 0x4 - core index']
  #allocation1 [shape = 'u32[72,128]{1,0:T(1,128)}', space=vmem, size = 0x9000, scoped, tag = 'internal scratch']
  %s0 = inlined_call_operand.vmem [shape: f32[2,16,64], index: 0, kind: input, shape index: {}]
  %s1 = inlined_call_operand.vmem [shape: f32[2,16,64], index: 1, kind: input, shape index: {}]
  %s2 = inlined_call_operand.vmem [shape: f32[16,16], index: 2, kind: input, shape index: {}]
  %s3 = inlined_call_operand.vmem [shape: f32[64,64], index: 3, kind: input, shape index: {}]
  %s4 = inlined_call_operand.vmem [shape: f32[2,8,128], index: 4, kind: output, shape index: {}]
  %s5 = sld [smem:[#allocation0]]
  $region49: #{mse_ssim_loss.1} parent=0
    _
  %s7 = ssub.s32 1, %s5
  %s8 = scalar_select 0, %s7, %s5
  loop: start=0, step=1, limit=4
  $region2: #{mse_ssim_loss.1} parent=0 // loop_pre_header
    _
  $region3: #{mse_ssim_loss.1} parent=0 // loop_header
    %s10 = sphi 0, %s14
    %p11 = scmp.ge.s32.totalorder %s10, 4
    %s20 = sphi 0, %s22
    %s23 = sphi 0, %s20
    %s24 = sphi 0, %s23
    %s40 = sphi 0, %s24
    %s46 = sphi 0, %s48
    %s49 = sphi 0, %s46
    %s50 = sphi 0, %s49
    %s66 = sphi 0, %s50
    %s70 = sphi 0, %s70
    %s72 = sphi 0, %s70
    %s73 = sphi 0, %s72
    %s87 = sphi 0, %s73
    %s91 = sphi 0, %s91
    %s93 = sphi 0, %s91
    %s94 = sphi 0, %s93
    %s108 = sphi 0, %s94
    %s114 = sphi 0, %s116
    %s117 = sphi 0, %s114
    %s118 = sphi 0, %s117
    %s134 = sphi 0, %s118
  $region4: #{mse_ssim_loss.1} parent=0 // loop_header_branch
    %13 = sbr.rel (%p11) target = $region8
  $region5: #{mse_ssim_loss.1} parent=0 // loop_body
    %s15 = ssub.s32 %s10, 1
    %s16 = ssub.s32 %s10, 2
    %s17 = sadd.s32 %s10, 1
    %s18 = ssub.s32 %s10, %s17
    %p19 = scmp.eq.s32.totalorder %s18, 0
    %s21 = sadd.s32 %s20, 1
    %s22 = scalar_select %p19, %s20, %s21
    %p25 = pneg %p19
    %p26 = scmp.eq.s32.totalorder %s10, 1
    %p27 = por %p25, %p26
    %p28 = scmp.ne.s32.totalorder %s20, %s23
    %p29 = scmp.eq.s32.totalorder %s10, 0
    %p30 = por %p28, %p29
    %p31 = scmp.ne.s32.totalorder %s20, %s23
    %p32 = scmp.eq.s32.totalorder %s15, 1
    %p33 = por %p31, %p32
    %p34 = scmp.ne.s32.totalorder %s23, %s24
    %p35 = scmp.eq.s32.totalorder %s15, 0
    %p36 = por %p34, %p35
    %p37 = scmp.ne.s32.totalorder %s23, %s24
    %p38 = scmp.eq.s32.totalorder %s16, 1
    %p39 = por %p37, %p38
    %p41 = scmp.ne.s32.totalorder %s24, %s40
    %p42 = scmp.eq.s32.totalorder %s16, 0
    %p43 = por %p41, %p42
    %s44 = ssub.s32 %s10, %s17
    %p45 = scmp.eq.s32.totalorder %s44, 0
    %s47 = sadd.s32 %s46, 1
    %s48 = scalar_select %p45, %s46, %s47
    %p51 = pneg %p45
    %p52 = scmp.eq.s32.totalorder %s10, 1
    %p53 = por %p51, %p52
    %p54 = scmp.ne.s32.totalorder %s46, %s49
    %p55 = scmp.eq.s32.totalorder %s10, 0
    %p56 = por %p54, %p55
    %p57 = scmp.ne.s32.totalorder %s46, %s49
    %p58 = scmp.eq.s32.totalorder %s15, 1
    %p59 = por %p57, %p58
    %p60 = scmp.ne.s32.totalorder %s49, %s50
    %p61 = scmp.eq.s32.totalorder %s15, 0
    %p62 = por %p60, %p61
    %p63 = scmp.ne.s32.totalorder %s49, %s50
    %p64 = scmp.eq.s32.totalorder %s16, 1
    %p65 = por %p63, %p64
    %p67 = scmp.ne.s32.totalorder %s50, %s66
    %p68 = scmp.eq.s32.totalorder %s16, 0
    %p69 = por %p67, %p68
    %s71 = sadd.s32 %s70, 1
    %p74 = scmp.eq.s32.totalorder %s10, 1
    %p75 = scmp.ne.s32.totalorder %s70, %s72
    %p76 = scmp.eq.s32.totalorder %s10, 0
    %p77 = por %p75, %p76
    %p78 = scmp.ne.s32.totalorder %s70, %s72
    %p79 = scmp.eq.s32.totalorder %s15, 1
    %p80 = por %p78, %p79
    %p81 = scmp.ne.s32.totalorder %s72, %s73
    %p82 = scmp.eq.s32.totalorder %s15, 0
    %p83 = por %p81, %p82
    %p84 = scmp.ne.s32.totalorder %s72, %s73
    %p85 = scmp.eq.s32.totalorder %s16, 1
    %p86 = por %p84, %p85
    %p88 = scmp.ne.s32.totalorder %s73, %s87
    %p89 = scmp.eq.s32.totalorder %s16, 0
    %p90 = por %p88, %p89
    %s92 = sadd.s32 %s91, 1
    %p95 = scmp.eq.s32.totalorder %s10, 1
    %p96 = scmp.ne.s32.totalorder %s91, %s93
    %p97 = scmp.eq.s32.totalorder %s10, 0
    %p98 = por %p96, %p97
    %p99 = scmp.ne.s32.totalorder %s91, %s93
    %p100 = scmp.eq.s32.totalorder %s15, 1
    %p101 = por %p99, %p100
    %p102 = scmp.ne.s32.totalorder %s93, %s94
    %p103 = scmp.eq.s32.totalorder %s15, 0
    %p104 = por %p102, %p103
    %p105 = scmp.ne.s32.totalorder %s93, %s94
    %p106 = scmp.eq.s32.totalorder %s16, 1
    %p107 = por %p105, %p106
    %p109 = scmp.ne.s32.totalorder %s94, %s108
    %p110 = scmp.eq.s32.totalorder %s16, 0
    %p111 = por %p109, %p110
    %s112 = ssub.s32 %s10, %s17
    %p113 = scmp.eq.s32.totalorder %s112, 0
    %s115 = sadd.s32 %s114, 1
    %s116 = scalar_select %p113, %s114, %s115
    %p119 = pneg %p113
    %p120 = scmp.eq.s32.totalorder %s10, 1
    %p121 = por %p119, %p120
    %p122 = scmp.ne.s32.totalorder %s114, %s117
    %p123 = scmp.eq.s32.totalorder %s10, 0
    %p124 = por %p122, %p123
    %p125 = scmp.ne.s32.totalorder %s114, %s117
    %p126 = scmp.eq.s32.totalorder %s15, 1
    %p127 = por %p125, %p126
    %p128 = scmp.ne.s32.totalorder %s117, %s118
    %p129 = scmp.eq.s32.totalorder %s15, 0
    %p130 = por %p128, %p129
    %p131 = scmp.ne.s32.totalorder %s117, %s118
    %p132 = scmp.eq.s32.totalorder %s16, 1
    %p133 = por %p131, %p132
    %p135 = scmp.ne.s32.totalorder %s118, %s134
    %p136 = scmp.eq.s32.totalorder %s16, 0
    %p137 = por %p135, %p136
    %p138 = scmp.le.s32.totalorder 1, %s10
    %p139 = scmp.lt.s32.totalorder %s10, 3
    %p140 = pnand %p138, %p139
    %p141 = pneg %p140
    // Predicated region
    $region9: #{mse_ssim_loss.1} parent=5 // pred_check
      _
    $region10: #{mse_ssim_loss.1} parent=5 // pred_check_branch
      %143 = sbr.rel (%p140) target = $region12
    $region11: #{mse_ssim_loss.1} parent=5 // pred_region
      %s144 = ssub.s32 %s10, 1
      // Predicated region
      $region13: #{mse_ssim_loss.1} parent=11 // pred_check
        %p145 = pneg %p83
      $region14: #{mse_ssim_loss.1} parent=11 // pred_check_branch
        %147 = sbr.rel (%p145) target = $region16
      $region15: #{mse_ssim_loss.1} parent=11 // pred_region
        _
      $region16: #{mse_ssim_loss.1} parent=11 // pred_fallthru
        _
      // Predicated region
      $region17: #{mse_ssim_loss.1} parent=11 // pred_check
        %p148 = pneg %p104
      $region18: #{mse_ssim_loss.1} parent=11 // pred_check_branch
        %150 = sbr.rel (%p148) target = $region20
      $region19: #{mse_ssim_loss.1} parent=11 // pred_region
        _
      $region20: #{mse_ssim_loss.1} parent=11 // pred_fallthru
        _
    $region12: #{mse_ssim_loss.1} parent=5 // pred_fallthru
      _
    %p151 = scmp.lt.s32.totalorder %s10, 2
    // Predicated region
    $region21: #{mse_ssim_loss.1} parent=5 // pred_check
      %p152 = pneg %p151
    $region22: #{mse_ssim_loss.1} parent=5 // pred_check_branch
      %154 = sbr.rel (%p152) target = $region24
    $region23: #{mse_ssim_loss.1} parent=5 // pred_region
      // Predicated region
      $region25: #{mse_ssim_loss.1} parent=23 // pred_check
        %p155 = pneg %p30
      $region26: #{mse_ssim_loss.1} parent=23 // pred_check_branch
        %157 = sbr.rel (%p155) target = $region28
      $region27: #{mse_ssim_loss.1} parent=23 // pred_region
        %p158 = scmp.lt.s32.totalorder %s10, 1
        %s159 = scalar_select %p158, %s10, 1
        %s160 = smul.addr %s159, 2
        %s161 = smul.addr %s160, 8
        %s162 = scalar_lea.vmem %s0, %s161
      $region28: #{mse_ssim_loss.1} parent=23 // pred_fallthru
        _
      // Predicated region
      $region29: #{mse_ssim_loss.1} parent=23 // pred_check
        %p163 = pneg %p56
      $region30: #{mse_ssim_loss.1} parent=23 // pred_check_branch
        %165 = sbr.rel (%p163) target = $region32
      $region31: #{mse_ssim_loss.1} parent=23 // pred_region
        %p166 = scmp.lt.s32.totalorder %s10, 1
        %s167 = scalar_select %p166, %s10, 1
        %s168 = smul.addr %s167, 2
        %s169 = smul.addr %s168, 8
        %s170 = scalar_lea.vmem %s1, %s169
      $region32: #{mse_ssim_loss.1} parent=23 // pred_fallthru
        _
    $region24: #{mse_ssim_loss.1} parent=5 // pred_fallthru
      _
    %p171 = scmp.le.s32.totalorder 1, %s10
    %p172 = scmp.lt.s32.totalorder %s10, 3
    %p173 = pnand %p171, %p172
    %p174 = pneg %p173
    // Predicated region
    $region33: #{mse_ssim_loss.1} parent=5 // pred_check
      _
    $region34: #{mse_ssim_loss.1} parent=5 // pred_check_branch
      %176 = sbr.rel (%p173) target = $region36
    $region35: #{mse_ssim_loss.1} parent=5 // pred_region
      %s177 = ssub.s32 %s10, 1
      %p178 = scmp.lt.s32.totalorder %s15, 1
      %s179 = scalar_select %p178, %s15, 1
      %s180 = smul.addr %s179, 2
      %s181 = smul.addr %s180, 8
      %s182 = scalar_lea.vmem %s0, %s181
      %p183 = pneg %p36
      %p184 = pneg %p33
      %p185 = scmp.lt.s32.totalorder %s15, 1
      %s186 = scalar_select %p185, %s15, 1
      %s187 = smul.addr %s186, 2
      %s188 = smul.addr %s187, 8
      %s189 = scalar_lea.vmem %s1, %s188
      %p190 = pneg %p62
      %p191 = pneg %p59
      %p192 = pneg %p83
      %p193 = pneg %p80
      %p194 = pneg %p104
      %p195 = pneg %p101
      %p196 = pneg %p130
      %p197 = pneg %p127
      %p198 = scmp.lt.s32.totalorder %s15, 1
      %s199 = scalar_select %p198, %s15, 1
      %s200 = smul.addr %s199, 8
      %s201 = scalar_lea.vmem %s4, %s200
      %p202 = scmp.lt.s32.totalorder %s15, 1
      %s203 = scalar_select %p202, %s15, 1
      %s204 = smul.addr %s203, 2
      %s205 = smul.addr %s204, 8
      %s206 = scalar_lea.vmem %s0, %s205
      %p207 = scmp.lt.s32.totalorder %s15, 1
      %s208 = scalar_select %p207, %s15, 1
      %s209 = smul.addr %s208, 2
      %s210 = smul.addr %s209, 8
      %s211 = scalar_lea.vmem %s1, %s210
      %p212 = scmp.lt.s32.totalorder %s15, 1
      %s213 = scalar_select %p212, %s15, 1
      %s214 = smul.addr %s213, 8
      %s215 = scalar_lea.vmem %s4, %s214
      %v216 = vld [vmem:[%s2] sm:$0xff]
      %v217 = vld [vmem:[%s2 + $0x8] sm:$0xff]
      %v218 = vld [vmem:[%s3] sm:$0xff]
      %v219 = vld [vmem:[%s3 + $0x8] sm:$0xff]
      %v220 = vld [vmem:[%s3 + $0x10] sm:$0xff]
      %v221 = vld [vmem:[%s3 + $0x18] sm:$0xff]
      %v222 = vld [vmem:[%s3 + $0x20] sm:$0xff]
      %v223 = vld [vmem:[%s3 + $0x28] sm:$0xff]
      %v224 = vld [vmem:[%s3 + $0x30] sm:$0xff]
      %v225 = vld [vmem:[%s3 + $0x38] sm:$0xff]
      %v226 = vld [vmem:[%s206] sm:$0xff]
      %v227 = vld [vmem:[%s206 + $0x8] sm:$0xff]
      %v228 = vld [vmem:[%s211] sm:$0xff]
      %v229 = vld [vmem:[%s211 + $0x8] sm:$0xff]
      %v230 = vsub.f32 %v226, %v228
      %v231 = vsub.f32 %v227, %v229
      %v232 = vmul.f32 %v230, %v230
      %v233 = vmul.f32 %v231, %v231
      %vm234 = vcmask 523264
      %v235 = vsel %vm234, %v232, 0.0
      %v236 = vsel %vm234, %v233, 0.0
      %v237 = vadd.f32 %v235, %v236
      %238 = vadd.xlane.f32.xlu0 %v237
      %v239 = vpop.xlane.xlu0 %238
      %v240 = vrot.slane %v239, 4
      %v241 = vadd.f32 %v239, %v240
      %v242 = vrot.slane %v241, 2
      %v243 = vadd.f32 %v241, %v242
      %v244 = vrot.slane %v243, 1
      %v245 = vadd.f32 %v243, %v244
      %s246 = vtos %v245
      %s247 = sadd.f32 %s246, 0.0
      %vm248 = vcmask 130048
      %v250 = vsel %vm248, %v216, 0
      %v253 = vsel %vm248, %v217, 0
      %255 = vmatpush.msra.mxu0 0.0
      %256 = vmatpush.msra.mxu0 0.0
      %257 = vmatpush.msra.mxu0 0.0
      %258 = vmatpush.msra.mxu0 0.0
      %259 = vmatpush.msra.mxu0 0.0
      %260 = vmatpush.msra.mxu0 0.0
      %261 = vmatpush.msra.mxu0 0.0
      %262 = vmatpush.msra.mxu0 0.0
      %263 = vmatpush.msra.mxu0 0.0
      %264 = vmatpush.msra.mxu0 0.0
      %265 = vmatpush.msra.mxu0 0.0
      %266 = vmatpush.msra.mxu0 0.0
      %267 = vmatpush.msra.mxu0 0.0
      %268 = vmatpush.msra.mxu0 0.0
      %269 = vmatpush.msra.mxu0 %v227
      %270 = vmatpush.msra.mxu0 %v226
      %271 = vmatmul.f32.gmra.mxu0 %v250
      %v272 = vpop.f32.mrf.mxu0
      %v273 = vadd.f32 0.0, %v272
      %274 = vmatmul.f32.gmra.mxu0 %v253
      %v275 = vpop.f32.mrf.mxu0
      %v276 = vadd.f32 0.0, %v275
      %277 = vdwg.mxu0
      %v279 = vsel %vm234, %v273, 0
      %v282 = vsel %vm234, %v276, 0
      %284 = vmatpush.msra.mxu0 0.0
      %285 = vmatpush.msra.mxu0 0.0
      %286 = vmatpush.msra.mxu0 0.0
      %287 = vmatpush.msra.mxu0 0.0
      %288 = vmatpush.msra.mxu0 0.0
      %289 = vmatpush.msra.mxu0 0.0
      %290 = vmatpush.msra.mxu0 0.0
      %291 = vmatpush.msra.mxu0 0.0
      %292 = vmatpush.msra.mxu0 %v225
      %293 = vmatpush.msra.mxu0 %v224
      %294 = vmatpush.msra.mxu0 %v223
      %295 = vmatpush.msra.mxu0 %v222
      %296 = vmatpush.msra.mxu0 %v221
      %297 = vmatpush.msra.mxu0 %v220
      %298 = vmatpush.msra.mxu0 %v219
      %299 = vmatpush.msra.mxu0 %v218
      %300 = vmatmul.f32.gmra.mxu0 %v279
      %v301 = vpop.f32.mrf.mxu0
      %v302 = vadd.f32 0.0, %v301
      %303 = vmatmul.f32.gmra.mxu0 %v282
      %v304 = vpop.f32.mrf.mxu0
      %v305 = vadd.f32 0.0, %v304
      %306 = vdwg.mxu0
      %307 = vmatpush.msra.mxu0 0.0
      %308 = vmatpush.msra.mxu0 0.0
      %309 = vmatpush.msra.mxu0 0.0
      %310 = vmatpush.msra.mxu0 0.0
      %311 = vmatpush.msra.mxu0 0.0
      %312 = vmatpush.msra.mxu0 0.0
      %313 = vmatpush.msra.mxu0 0.0
      %314 = vmatpush.msra.mxu0 0.0
      %315 = vmatpush.msra.mxu0 0.0
      %316 = vmatpush.msra.mxu0 0.0
      %317 = vmatpush.msra.mxu0 0.0
      %318 = vmatpush.msra.mxu0 0.0
      %319 = vmatpush.msra.mxu0 0.0
      %320 = vmatpush.msra.mxu0 0.0
      %321 = vmatpush.msra.mxu0 %v229
      %322 = vmatpush.msra.mxu0 %v228
      %323 = vmatmul.f32.gmra.mxu0 %v250
      %v324 = vpop.f32.mrf.mxu0
      %v325 = vadd.f32 0.0, %v324
      %326 = vmatmul.f32.gmra.mxu0 %v253
      %v327 = vpop.f32.mrf.mxu0
      %v328 = vadd.f32 0.0, %v327
      %329 = vdwg.mxu0
      %v331 = vsel %vm234, %v325, 0
      %v334 = vsel %vm234, %v328, 0
      %336 = vmatpush.msra.mxu0 0.0
      %337 = vmatpush.msra.mxu0 0.0
      %338 = vmatpush.msra.mxu0 0.0
      %339 = vmatpush.msra.mxu0 0.0
      %340 = vmatpush.msra.mxu0 0.0
      %341 = vmatpush.msra.mxu0 0.0
      %342 = vmatpush.msra.mxu0 0.0
      %343 = vmatpush.msra.mxu0 0.0
      %344 = vmatpush.msra.mxu0 %v225
      %345 = vmatpush.msra.mxu0 %v224
      %346 = vmatpush.msra.mxu0 %v223
      %347 = vmatpush.msra.mxu0 %v222
      %348 = vmatpush.msra.mxu0 %v221
      %349 = vmatpush.msra.mxu0 %v220
      %350 = vmatpush.msra.mxu0 %v219
      %351 = vmatpush.msra.mxu0 %v218
      %352 = vmatmul.f32.gmra.mxu0 %v331
      %v353 = vpop.f32.mrf.mxu0
      %v354 = vadd.f32 0.0, %v353
      %355 = vmatmul.f32.gmra.mxu0 %v334
      %v356 = vpop.f32.mrf.mxu0
      %v357 = vadd.f32 0.0, %v356
      %358 = vdwg.mxu0
      %v359 = vmul.f32 %v302, %v302
      %v360 = vmul.f32 %v305, %v305
      %v361 = vmul.f32 %v354, %v354
      %v362 = vmul.f32 %v357, %v357
      %v363 = vmul.f32 %v302, %v354
      %v364 = vmul.f32 %v305, %v357
      %v365 = vmul.f32 %v226, %v226
      %v366 = vmul.f32 %v227, %v227
      %367 = vmatpush.msra.mxu0 0.0
      %368 = vmatpush.msra.mxu0 0.0
      %369 = vmatpush.msra.mxu0 0.0
      %370 = vmatpush.msra.mxu0 0.0
      %371 = vmatpush.msra.mxu0 0.0
      %372 = vmatpush.msra.mxu0 0.0
      %373 = vmatpush.msra.mxu0 0.0
      %374 = vmatpush.msra.mxu0 0.0
      %375 = vmatpush.msra.mxu0 0.0
      %376 = vmatpush.msra.mxu0 0.0
      %377 = vmatpush.msra.mxu0 0.0
      %378 = vmatpush.msra.mxu0 0.0
      %379 = vmatpush.msra.mxu0 0.0
      %380 = vmatpush.msra.mxu0 0.0
      %381 = vmatpush.msra.mxu0 %v366
      %382 = vmatpush.msra.mxu0 %v365
      %383 = vmatmul.f32.gmra.mxu0 %v250
      %v384 = vpop.f32.mrf.mxu0
      %v385 = vadd.f32 0.0, %v384
      %386 = vmatmul.f32.gmra.mxu0 %v253
      %v387 = vpop.f32.mrf.mxu0
      %v388 = vadd.f32 0.0, %v387
      %389 = vdwg.mxu0
      %v391 = vsel %vm234, %v385, 0
      %v394 = vsel %vm234, %v388, 0
      %396 = vmatpush.msra.mxu0 0.0
      %397 = vmatpush.msra.mxu0 0.0
      %398 = vmatpush.msra.mxu0 0.0
      %399 = vmatpush.msra.mxu0 0.0
      %400 = vmatpush.msra.mxu0 0.0
      %401 = vmatpush.msra.mxu0 0.0
      %402 = vmatpush.msra.mxu0 0.0
      %403 = vmatpush.msra.mxu0 0.0
      %404 = vmatpush.msra.mxu0 %v225
      %405 = vmatpush.msra.mxu0 %v224
      %406 = vmatpush.msra.mxu0 %v223
      %407 = vmatpush.msra.mxu0 %v222
      %408 = vmatpush.msra.mxu0 %v221
      %409 = vmatpush.msra.mxu0 %v220
      %410 = vmatpush.msra.mxu0 %v219
      %411 = vmatpush.msra.mxu0 %v218
      %412 = vmatmul.f32.gmra.mxu0 %v391
      %v413 = vpop.f32.mrf.mxu0
      %v414 = vadd.f32 0.0, %v413
      %415 = vmatmul.f32.gmra.mxu0 %v394
      %v416 = vpop.f32.mrf.mxu0
      %v417 = vadd.f32 0.0, %v416
      %418 = vdwg.mxu0
      %v419 = vsub.f32 %v414, %v359
      %v420 = vsub.f32 %v417, %v360
      %v421 = vmul.f32 %v228, %v228
      %v422 = vmul.f32 %v229, %v229
      %423 = vmatpush.msra.mxu0 0.0
      %424 = vmatpush.msra.mxu0 0.0
      %425 = vmatpush.msra.mxu0 0.0
      %426 = vmatpush.msra.mxu0 0.0
      %427 = vmatpush.msra.mxu0 0.0
      %428 = vmatpush.msra.mxu0 0.0
      %429 = vmatpush.msra.mxu0 0.0
      %430 = vmatpush.msra.mxu0 0.0
      %431 = vmatpush.msra.mxu0 0.0
      %432 = vmatpush.msra.mxu0 0.0
      %433 = vmatpush.msra.mxu0 0.0
      %434 = vmatpush.msra.mxu0 0.0
      %435 = vmatpush.msra.mxu0 0.0
      %436 = vmatpush.msra.mxu0 0.0
      %437 = vmatpush.msra.mxu0 %v422
      %438 = vmatpush.msra.mxu0 %v421
      %439 = vmatmul.f32.gmra.mxu0 %v250
      %v440 = vpop.f32.mrf.mxu0
      %v441 = vadd.f32 0.0, %v440
      %442 = vmatmul.f32.gmra.mxu0 %v253
      %v443 = vpop.f32.mrf.mxu0
      %v444 = vadd.f32 0.0, %v443
      %445 = vdwg.mxu0
      %v447 = vsel %vm234, %v441, 0
      %v450 = vsel %vm234, %v444, 0
      %452 = vmatpush.msra.mxu0 0.0
      %453 = vmatpush.msra.mxu0 0.0
      %454 = vmatpush.msra.mxu0 0.0
      %455 = vmatpush.msra.mxu0 0.0
      %456 = vmatpush.msra.mxu0 0.0
      %457 = vmatpush.msra.mxu0 0.0
      %458 = vmatpush.msra.mxu0 0.0
      %459 = vmatpush.msra.mxu0 0.0
      %460 = vmatpush.msra.mxu0 %v225
      %461 = vmatpush.msra.mxu0 %v224
      %462 = vmatpush.msra.mxu0 %v223
      %463 = vmatpush.msra.mxu0 %v222
      %464 = vmatpush.msra.mxu0 %v221
      %465 = vmatpush.msra.mxu0 %v220
      %466 = vmatpush.msra.mxu0 %v219
      %467 = vmatpush.msra.mxu0 %v218
      %468 = vmatmul.f32.gmra.mxu0 %v447
      %v469 = vpop.f32.mrf.mxu0
      %v470 = vadd.f32 0.0, %v469
      %471 = vmatmul.f32.gmra.mxu0 %v450
      %v472 = vpop.f32.mrf.mxu0
      %v473 = vadd.f32 0.0, %v472
      %474 = vdwg.mxu0
      %v475 = vsub.f32 %v470, %v361
      %v476 = vsub.f32 %v473, %v362
      %v477 = vmul.f32 %v226, %v228
      %v478 = vmul.f32 %v227, %v229
      %479 = vmatpush.msra.mxu0 0.0
      %480 = vmatpush.msra.mxu0 0.0
      %481 = vmatpush.msra.mxu0 0.0
      %482 = vmatpush.msra.mxu0 0.0
      %483 = vmatpush.msra.mxu0 0.0
      %484 = vmatpush.msra.mxu0 0.0
      %485 = vmatpush.msra.mxu0 0.0
      %486 = vmatpush.msra.mxu0 0.0
      %487 = vmatpush.msra.mxu0 0.0
      %488 = vmatpush.msra.mxu0 0.0
      %489 = vmatpush.msra.mxu0 0.0
      %490 = vmatpush.msra.mxu0 0.0
      %491 = vmatpush.msra.mxu0 0.0
      %492 = vmatpush.msra.mxu0 0.0
      %493 = vmatpush.msra.mxu0 %v478
      %494 = vmatpush.msra.mxu0 %v477
      %495 = vmatmul.f32.gmra.mxu0 %v250
      %v496 = vpop.f32.mrf.mxu0
      %v497 = vadd.f32 0.0, %v496
      %498 = vmatmul.f32.gmra.mxu0 %v253
      %v499 = vpop.f32.mrf.mxu0
      %v500 = vadd.f32 0.0, %v499
      %501 = vdwg.mxu0
      %v503 = vsel %vm234, %v497, 0
      %v506 = vsel %vm234, %v500, 0
      %508 = vmatpush.msra.mxu0 0.0
      %509 = vmatpush.msra.mxu0 0.0
      %510 = vmatpush.msra.mxu0 0.0
      %511 = vmatpush.msra.mxu0 0.0
      %512 = vmatpush.msra.mxu0 0.0
      %513 = vmatpush.msra.mxu0 0.0
      %514 = vmatpush.msra.mxu0 0.0
      %515 = vmatpush.msra.mxu0 0.0
      %516 = vmatpush.msra.mxu0 %v225
      %517 = vmatpush.msra.mxu0 %v224
      %518 = vmatpush.msra.mxu0 %v223
      %519 = vmatpush.msra.mxu0 %v222
      %520 = vmatpush.msra.mxu0 %v221
      %521 = vmatpush.msra.mxu0 %v220
      %522 = vmatpush.msra.mxu0 %v219
      %523 = vmatpush.msra.mxu0 %v218
      %524 = vmatmul.f32.gmra.mxu0 %v503
      %v525 = vpop.f32.mrf.mxu0
      %v526 = vadd.f32 0.0, %v525
      %527 = vmatmul.f32.gmra.mxu0 %v506
      %v528 = vpop.f32.mrf.mxu0
      %v529 = vadd.f32 0.0, %v528
      %530 = vdwg.mxu0
      %v531 = vsub.f32 %v526, %v363
      %v532 = vsub.f32 %v529, %v364
      %v533 = vmul.f32 %v363, 2.0
      %v534 = vmul.f32 %v364, 2.0
      %v535 = vadd.f32 %v533, 0.0001
      %v536 = vadd.f32 %v534, 0.0001
      %v537 = vmul.f32 %v531, 2.0
      %v538 = vmul.f32 %v532, 2.0
      %v539 = vadd.f32 %v537, 0.0009
      %v540 = vadd.f32 %v538, 0.0009
      %v541 = vmul.f32 %v535, %v539
      %v542 = vmul.f32 %v536, %v540
      %v543 = vadd.f32 %v359, %v361
      %v544 = vadd.f32 %v360, %v362
      %v545 = vadd.f32 %v543, 0.0001
      %v546 = vadd.f32 %v544, 0.0001
      %v547 = vadd.f32 %v419, %v475
      %v548 = vadd.f32 %v420, %v476
      %v549 = vadd.f32 %v547, 0.0009
      %v550 = vadd.f32 %v548, 0.0009
      %v551 = vmul.f32 %v545, %v549
      %v552 = vmul.f32 %v546, %v550
      %v553 = vrcp.pop %v551
      %v554 = vmul.f32 %v551, %v553
      %v555 = vsub.f32 1.0, %v554
      %v556 = vmul.f32 %v553, %v555
      %v557 = vadd.f32 %v553, %v556
      %vm558 = vweird.f32 %v551
      %vm559 = vweird.f32 %v553
      %vm560 = vmor %vm558, %vm559
      %v561 = vsel %vm560, %v553, %v557
      %v562 = vand.u32 2147483647, %v551
      %vm563 = vcmp.eq.f32.partialorder %v562, 8.507059e+37
      %v564 = vand.u32 %v551, 2147483648
      %v565 = vor.u32 1.1754944e-38, %v564
      %v566 = vsel %vm563, %v565, %v561
      %v567 = vmul.f32 %v541, %v566
      %v568 = vrcp.pop %v552
      %v569 = vmul.f32 %v552, %v568
      %v570 = vsub.f32 1.0, %v569
      %v571 = vmul.f32 %v568, %v570
      %v572 = vadd.f32 %v568, %v571
      %vm573 = vweird.f32 %v552
      %vm574 = vweird.f32 %v568
      %vm575 = vmor %vm573, %vm574
      %v576 = vsel %vm575, %v568, %v572
      %v577 = vand.u32 2147483647, %v552
      %vm578 = vcmp.eq.f32.partialorder %v577, 8.507059e+37
      %v579 = vand.u32 %v552, 2147483648
      %v580 = vor.u32 1.1754944e-38, %v579
      %v581 = vsel %vm578, %v580, %v576
      %v582 = vmul.f32 %v542, %v581
      %v583 = vsel %vm234, %v567, 0.0
      %v584 = vsel %vm234, %v582, 0.0
      %v585 = vadd.f32 %v583, %v584
      %586 = vadd.xlane.f32.xlu0 %v585
      %v587 = vpop.xlane.xlu0 %586
      %v588 = vrot.slane %v587, 4
      %v589 = vadd.f32 %v587, %v588
      %v590 = vrot.slane %v589, 2
      %v591 = vadd.f32 %v589, %v590
      %v592 = vrot.slane %v591, 1
      %v593 = vadd.f32 %v591, %v592
      %s594 = vtos %v593
      %s595 = sadd.f32 %s594, 0.0
      %v596 = vlaneseq
      %v597 = vshrl.u32 %v596, 7
      %v598 = vlaneseq
      %v599 = vand.u32 %v598, 127
      %vm600 = vcmp.eq.s32.totalorder %v597, 0
      %vm601 = vcmp.eq.s32.totalorder %v599, 0
      %vm602 = vmand %vm600, %vm601
      %v603 = vstv %s595
      %v604 = vsel %vm602, %v603, 0.0
      %vm605 = vcmp.eq.s32.totalorder %v599, 1
      %vm606 = vmand %vm600, %vm605
      %v607 = vstv %s247
      %v608 = vsel %vm606, %v607, 0.0
      %v609 = vadd.f32 %v604, %v608
      %610 = vst [vmem:[%s215] sm:$0xff] %v609
      %p611 = scmp.lt.s32.totalorder %s15, 1
      %s612 = scalar_select %p611, %s15, 1
      %s613 = smul.addr %s612, 8
      %s614 = scalar_lea.vmem %s4, %s613
      // Predicated region
      $region37: #{mse_ssim_loss.1} parent=35 // pred_check
        %p615 = pneg %p127
      $region38: #{mse_ssim_loss.1} parent=35 // pred_check_branch
        %617 = sbr.rel (%p615) target = $region40
      $region39: #{mse_ssim_loss.1} parent=35 // pred_region
        _
      $region40: #{mse_ssim_loss.1} parent=35 // pred_fallthru
        _
    $region36: #{mse_ssim_loss.1} parent=5 // pred_fallthru
      _
    %p618 = scmp.le.s32.totalorder 2, %s10
    // Predicated region
    $region41: #{mse_ssim_loss.1} parent=5 // pred_check
      %p619 = pneg %p618
    $region42: #{mse_ssim_loss.1} parent=5 // pred_check_branch
      %621 = sbr.rel (%p619) target = $region44
    $region43: #{mse_ssim_loss.1} parent=5 // pred_region
      %s622 = ssub.s32 %s10, 2
      // Predicated region
      $region45: #{mse_ssim_loss.1} parent=43 // pred_check
        %p623 = pneg %p133
      $region46: #{mse_ssim_loss.1} parent=43 // pred_check_branch
        %625 = sbr.rel (%p623) target = $region48
      $region47: #{mse_ssim_loss.1} parent=43 // pred_region
        %p626 = scmp.lt.s32.totalorder %s16, 1
        %s627 = scalar_select %p626, %s16, 1
        %s628 = smul.addr %s627, 8
        %s629 = scalar_lea.vmem %s4, %s628
      $region48: #{mse_ssim_loss.1} parent=43 // pred_fallthru
        _
    $region44: #{mse_ssim_loss.1} parent=5 // pred_fallthru
      _
  $region6: #{mse_ssim_loss.1} parent=0 // loop_footer
    %s14 = sadd.s32 1, %s10
  $region7: #{mse_ssim_loss.1} parent=0 // loop_footer_branch
    %9 = sbr.rel target = $region3
  $region8: #{mse_ssim_loss.1} parent=0 // loop_exit
    _

</llo_original>
